<compile_context>
chip_gen: v7x
topology: tpu7x:2x2x1
jax: 0.10.0
libtpu: 0.0.40
codegen_flags: <defaults>
</compile_context>

<pallas_src>
import functools

import jax
import jax.numpy as jnp
from jax.experimental import pallas as pl
from jax.experimental.pallas import tpu as pltpu


def _round_up(x: int, m: int) -> int:
    return ((x + m - 1) // m) * m


def _adaptive_hinge_kernel(pos_ref, neg_ref, out_ref, m_sc, *, s_total: int, ts: int):
    """One (B-tile, S-tile) grid step.

    pos_ref: (1, TB)  native dtype -- positive scores for this B-tile
    neg_ref: (TS, TB) native dtype -- one S-tile of negatives for this B-tile
    out_ref: (1, TB)  f32          -- per-column hinge values (written on last S step)
    m_sc:    (1, TB)  f32 scratch  -- running column max over the S (reduction) axis
    """
    k = pl.program_id(1)

    @pl.when(k == 0)
    def _init():
        m_sc[...] = jnp.full_like(m_sc, -jnp.inf)

    # Cast in VMEM (VPU cast hides under the DMA); HBM traffic stays native-dtype.
    neg = neg_ref[...].astype(jnp.float32)                        # (TS, TB)

    if s_total % ts != 0:
        # Last S-tile overhangs the array: mask out-of-bounds rows with -inf so
        # garbage in the padded region never wins the per-column max.
        row = jax.lax.broadcasted_iota(jnp.int32, neg.shape, 0) + k * ts
        neg = jnp.where(row < s_total, neg, -jnp.inf)

    m_sc[...] = jnp.maximum(m_sc[...], jnp.max(neg, axis=0, keepdims=True))

    @pl.when(k == pl.num_programs(1) - 1)
    def _finalize():
        pos = pos_ref[...].astype(jnp.float32)                    # (1, TB)
        # Out-of-bounds B lanes (if any) hold garbage, but Pallas drops them
        # on writeback since out_shape is the true (1, B).
        out_ref[...] = jnp.maximum(1.0 - (pos - m_sc[...]), 0.0)


def adaptive_hinge_loss(positive_score: jax.Array, negative_scores: jax.Array,
                        *, tb: int = 1024, ts: int = 512) -> jax.Array:
    """positive_score: (...,), negative_scores: (S, ...) -> scalar f32 loss."""
    positive_score = jnp.asarray(positive_score)
    negative_scores = jnp.asarray(negative_scores)
    if positive_score.shape != negative_scores.shape[1:]:
        raise ValueError(
            f"Shape mismatch: {positive_score.shape}, {negative_scores.shape[1:]}")
    if not jnp.issubdtype(positive_score.dtype, jnp.floating):
        positive_score = positive_score.astype(jnp.float32)
    if not jnp.issubdtype(negative_scores.dtype, jnp.floating):
        negative_scores = negative_scores.astype(jnp.float32)

    S = negative_scores.shape[0]
    pos2d = positive_score.reshape(1, -1)                         # (1, B)
    neg2d = negative_scores.reshape(S, -1)                        # (S, B)
    B = pos2d.shape[1]

    # Lane axis (B) tiles are multiples of 128; sublane axis (S) tiles multiples of 8.
    TB = _round_up(min(tb, _round_up(B, 128)), 128)
    TS = _round_up(min(ts, _round_up(S, 8)), 8)

    grid = (pl.cdiv(B, TB), pl.cdiv(S, TS))   # B outer (parallel), S inner (reduction)

    kernel = functools.partial(_adaptive_hinge_kernel, s_total=S, ts=TS)

    hinge_cols = pl.pallas_call(
        kernel,
        out_shape=jax.ShapeDtypeStruct((1, B), jnp.float32),
        grid_spec=pltpu.PrefetchScalarGridSpec(
            num_scalar_prefetch=0,
            grid=grid,
            in_specs=[
                pl.BlockSpec((1, TB), lambda i, k: (0, i)),    # positive scores
                pl.BlockSpec((TS, TB), lambda i, k: (k, i)),   # negative scores
            ],
            out_specs=pl.BlockSpec((1, TB), lambda i, k: (0, i)),
            scratch_shapes=[pltpu.VMEM((1, TB), jnp.float32)],
        ),
        compiler_params=pltpu.CompilerParams(
            dimension_semantics=("parallel", "arbitrary"),
            vmem_limit_bytes=32 * 1024 * 1024,
        ),
    )(pos2d, neg2d)

    # Tiny final reduction over the true B columns; divide by the true batch size.
    return jnp.sum(hinge_cols) / jnp.float32(B)


def _reference(pos, neg):
    p = pos.astype(jnp.float32)
    n = neg.astype(jnp.float32)
    return jnp.mean(jnp.maximum(1.0 - (p - jnp.max(n, axis=0)), 0.0))


if __name__ == "__main__":
    key = jax.random.PRNGKey(0)
    k1, k2, k3, k4, k5, k6 = jax.random.split(key, 6)

    # Case 1: tiny shapes from the PyTorch docstring example style (S=5, B=8), f32.
    B, S = 8, 5
    positive_score = jax.random.normal(k1, (B,), dtype=jnp.float32)
    negative_scores = jax.random.normal(k2, (S, B), dtype=jnp.float32)
    loss = jax.block_until_ready(adaptive_hinge_loss(positive_score, negative_scores))
    ref = _reference(positive_score, negative_scores)
    assert jnp.allclose(loss, ref, atol=1e-5, rtol=1e-5), (loss, ref)

    # Case 2: bf16 inputs + small tile sizes to exercise the ragged-edge masking
    # and the multi-tile (parallel B, reduction S) grid path.
    B2, S2 = 300, 20
    pos2 = jax.random.normal(k3, (B2,), dtype=jnp.bfloat16)
    neg2 = jax.random.normal(k4, (S2, B2), dtype=jnp.bfloat16)
    loss2 = jax.block_until_ready(adaptive_hinge_loss(pos2, neg2, tb=128, ts=8))
    ref2 = _reference(pos2, neg2)
    assert jnp.allclose(loss2, ref2, atol=1e-5, rtol=1e-5), (loss2, ref2)

    # Case 3: exactly tile-aligned shapes (no masking path), multi-tile grid.
    B3, S3 = 256, 16
    pos3 = jax.random.normal(k5, (B3,), dtype=jnp.float32)
    neg3 = jax.random.normal(k6, (S3, B3), dtype=jnp.float32)
    loss3 = jax.block_until_ready(adaptive_hinge_loss(pos3, neg3, tb=128, ts=8))
    ref3 = _reference(pos3, neg3)
    assert jnp.allclose(loss3, ref3, atol=1e-5, rtol=1e-5), (loss3, ref3)

    print("KERNEL_OK")
</pallas_src>

<mosaic_0001>
module attributes {stable_mosaic.version = 11 : i64} {
  func.func @_adaptive_hinge_kernel(%arg0: i32, %arg1: i32, %arg2: memref<1x128xf32, #tpu.memory_space<vmem>>, %arg3: memref<8x128xf32, #tpu.memory_space<vmem>>, %arg4: memref<1x128xf32, #tpu.memory_space<vmem>>, %arg5: memref<1x128xf32, #tpu.memory_space<vmem>>) attributes {dimension_semantics = [#tpu.dimension_semantics<parallel>, #tpu.dimension_semantics<arbitrary>], iteration_bounds = array<i64: 1, 1>, scalar_prefetch = 0 : i64, scratch_operands = 1 : i64, tpu.core_type = #tpu.core_type<tc>, window_params = [{transform_indices = @transform_0, window_bounds = array<i64: 1, 128>}, {transform_indices = @transform_1, window_bounds = array<i64: 8, 128>}, {transform_indices = @transform_2, window_bounds = array<i64: 1, 128>}]} {
    %c0_i32 = arith.constant 0 : i32
    %0 = arith.cmpi eq, %arg1, %c0_i32 : i32
    %1 = arith.extui %0 : i1 to i32
    %c0_i32_0 = arith.constant 0 : i32
    %2 = arith.cmpi ne, %1, %c0_i32_0 : i32
    scf.if %2 {
      %cst_9 = arith.constant 0xFF800000 : f32
      %20 = vector.broadcast %cst_9 : f32 to vector<1x128xf32>
      %c0_10 = arith.constant 0 : index
      %c0_11 = arith.constant 0 : index
      %21 = vector.load %arg5[%c0_10, %c0_11] : memref<1x128xf32, #tpu.memory_space<vmem>>, vector<1x128xf32>
      tpu.vector_store %arg5[%c0_10, %c0_11], %20 {strides = array<i32>} : memref<1x128xf32, #tpu.memory_space<vmem>>, vector<1x128xf32>,
    } else {
    }
    %c0 = arith.constant 0 : index
    %c0_1 = arith.constant 0 : index
    %3 = vector.load %arg3[%c0, %c0_1] : memref<8x128xf32, #tpu.memory_space<vmem>>, vector<8x128xf32>
    %4 = tpu.iota {dimensions = array<i32: 0>} : vector<8x128xi32>
    %c8_i32 = arith.constant 8 : i32
    %5 = arith.muli %arg1, %c8_i32 : i32
    %6 = vector.broadcast %5 : i32 to vector<8x128xi32>
    %7 = arith.addi %4, %6 : vector<8x128xi32>
    %c5_i32 = arith.constant 5 : i32
    %8 = vector.broadcast %c5_i32 : i32 to vector<8x128xi32>
    %9 = arith.cmpi slt, %7, %8 : vector<8x128xi32>
    %cst = arith.constant 0xFF800000 : f32
    %10 = vector.broadcast %cst : f32 to vector<8x128xf32>
    %11 = arith.select %9, %3, %10 : vector<8x128xi1>, vector<8x128xf32>
    %c0_2 = arith.constant 0 : index
    %c0_3 = arith.constant 0 : index
    %12 = vector.load %arg5[%c0_2, %c0_3] : memref<1x128xf32, #tpu.memory_space<vmem>>, vector<1x128xf32>
    %cst_4 = arith.constant dense<0xFF800000> : vector<128xf32>
    %13 = vector.multi_reduction <maximumf>, %11, %cst_4 [0] : vector<8x128xf32> to vector<128xf32>
    %14 = vector.shape_cast %13 : vector<128xf32> to vector<1x128xf32>
    %15 = arith.maximumf %12, %14 : vector<1x128xf32>
    %c0_5 = arith.constant 0 : index
    %c0_6 = arith.constant 0 : index
    %16 = vector.load %arg5[%c0_5, %c0_6] : memref<1x128xf32, #tpu.memory_space<vmem>>, vector<1x128xf32>
    tpu.vector_store %arg5[%c0_5, %c0_6], %15 {strides = array<i32>} : memref<1x128xf32, #tpu.memory_space<vmem>>, vector<1x128xf32>,
    %c0_i32_7 = arith.constant 0 : i32
    %17 = arith.cmpi eq, %arg1, %c0_i32_7 : i32
    %18 = arith.extui %17 : i1 to i32
    %c0_i32_8 = arith.constant 0 : i32
    %19 = arith.cmpi ne, %18, %c0_i32_8 : i32
    scf.if %19 {
      %c0_9 = arith.constant 0 : index
      %c0_10 = arith.constant 0 : index
      %20 = vector.load %arg2[%c0_9, %c0_10] : memref<1x128xf32, #tpu.memory_space<vmem>>, vector<1x128xf32>
      %c0_11 = arith.constant 0 : index
      %c0_12 = arith.constant 0 : index
      %21 = vector.load %arg5[%c0_11, %c0_12] : memref<1x128xf32, #tpu.memory_space<vmem>>, vector<1x128xf32>
      %22 = arith.subf %20, %21 : vector<1x128xf32>
      %cst_13 = arith.constant 1.000000e+00 : f32
      %23 = vector.broadcast %cst_13 : f32 to vector<1x128xf32>
      %24 = arith.subf %23, %22 : vector<1x128xf32>
      %cst_14 = arith.constant 0.000000e+00 : f32
      %25 = vector.broadcast %cst_14 : f32 to vector<1x128xf32>
      %26 = arith.maximumf %24, %25 : vector<1x128xf32>
      %c0_15 = arith.constant 0 : index
      %c0_16 = arith.constant 0 : index
      %27 = vector.load %arg4[%c0_15, %c0_16] : memref<1x128xf32, #tpu.memory_space<vmem>>, vector<1x128xf32>
      tpu.vector_store %arg4[%c0_15, %c0_16], %26 {strides = array<i32>} : memref<1x128xf32, #tpu.memory_space<vmem>>, vector<1x128xf32>,
    } else {
    }
    return
  }
  func.func @transform_0(%arg0: i32, %arg1: i32) -> (i32, i32) {
    %c0_i32 = arith.constant 0 : i32
    %c0_i32_0 = arith.constant 0 : i32
    return %c0_i32, %arg0 : i32, i32
  }
  func.func @transform_1(%arg0: i32, %arg1: i32) -> (i32, i32) {
    %c0_i32 = arith.constant 0 : i32
    return %arg1, %arg0 : i32, i32
  }
  func.func @transform_2(%arg0: i32, %arg1: i32) -> (i32, i32) {
    %c0_i32 = arith.constant 0 : i32
    %c0_i32_0 = arith.constant 0 : i32
    return %c0_i32, %arg0 : i32, i32
  }
}

</mosaic_0001>

<llo_original>
// kernel: tpu_custom_call.1
$region0: #{tpu_custom_call.1}
  #allocation0 [shape = 'u32[]', space=smem, size = 0x4, offset = 0x4, fixed_abs, tag = 'smem constant byte address 0x4 - core index']
  #allocation1 [shape = 'u32[144,128]{1,0:T(1,128)}', space=vmem, size = 0x12000, scoped, tag = 'internal scratch']
  #allocation2 [shape = 'f32[1,128]{1,0:T(1,128)}', space=vmem, size = 0x200, scoped, tag = 'scratch operand']
  %s0 = inlined_call_operand.hbm [shape: f32[1,8], index: 0, kind: input, shape index: {}]
  %s1 = inlined_call_operand.hbm [shape: f32[5,8], index: 1, kind: input, shape index: {}]
  %s2 = inlined_call_operand.hbm [shape: f32[1,8], index: 2, kind: output, shape index: {}]
  %s3 = sld [smem:[#allocation0]]
  $region34: #{tpu_custom_call.1} parent=0
    _
  %s5 = ssub.s32 1, %s3
  %s6 = scalar_select 0, %s5, %s3
  $region1: #{tpu_custom_call.1} parent=0
    #allocation3 [shape = 'u8[512]{0}', space=vmem, size = 0x400, scoped, tag = 'input window, operand 0, single buffered']
    #allocation4 [shape = 's32[1]{0}', space=sflag, size = 0x4, scoped, tag = 'scoped memory for tpu_custom_call.1']
    #allocation5 [shape = 's32[1]{0}', space=sflag, size = 0x4, scoped, tag = 'scoped memory for tpu_custom_call.1']
    #allocation6 [shape = 'u8[4096]{0}', space=vmem, size = 0x1000, scoped, tag = 'input window, operand 1, single buffered']
    #allocation7 [shape = 's32[1]{0}', space=sflag, size = 0x4, scoped, tag = 'scoped memory for tpu_custom_call.1']
    #allocation8 [shape = 'u8[512]{0}', space=vmem, size = 0x400, scoped, tag = 'output window, operand 0, single buffered']
    %7 = vsyncpa [#allocation4], 0
    %8 = vsyncpa [#allocation7], 0
    %9 = vsyncpa [#allocation5], 0
    // Predicated region
    $region2: #{tpu_custom_call.1} parent=1 // pred_check
      _
    $region3: #{tpu_custom_call.1} parent=1 // pred_check_branch
      %11 = sbr.rel (0) target = $region5
    $region4: #{tpu_custom_call.1} parent=1 // pred_region
      %s13 = ssub.s32 16, 16
      %14 = vsyncadd [#allocation4], %s13
      %s16 = sshll.u32 [#allocation3], 4
      %s17 = int_to_ptr.vmem [resolvable:$true] %s16
      %19 = dma.hbm_to_vmem [thread:$0]  %s0, 16, %s17, [#allocation4]
    $region5: #{tpu_custom_call.1} parent=1 // pred_fallthru
      _
    // Predicated region
    $region6: #{tpu_custom_call.1} parent=1 // pred_check
      _
    $region7: #{tpu_custom_call.1} parent=1 // pred_check_branch
      %21 = sbr.rel (0) target = $region9
    $region8: #{tpu_custom_call.1} parent=1 // pred_region
      %s23 = ssub.s32 128, 128
      %24 = vsyncadd [#allocation7], %s23
      %s26 = sshll.u32 [#allocation6], 4
      %s27 = int_to_ptr.vmem [resolvable:$true] %s26
      %29 = dma.hbm_to_vmem [thread:$0]  %s1, 128, %s27, [#allocation7]
    $region9: #{tpu_custom_call.1} parent=1 // pred_fallthru
      _
    // Predicated region
    $region10: #{tpu_custom_call.1} parent=1 // pred_check
      _
    $region11: #{tpu_custom_call.1} parent=1 // pred_check_branch
      %31 = sbr.rel (0) target = $region13
    $region12: #{tpu_custom_call.1} parent=1 // pred_region
      %32 = dma.done [#allocation4], 16
    $region13: #{tpu_custom_call.1} parent=1 // pred_fallthru
      _
    // Predicated region
    $region14: #{tpu_custom_call.1} parent=1 // pred_check
      _
    $region15: #{tpu_custom_call.1} parent=1 // pred_check_branch
      %34 = sbr.rel (0) target = $region17
    $region16: #{tpu_custom_call.1} parent=1 // pred_region
      %35 = dma.done [#allocation7], 128
    $region17: #{tpu_custom_call.1} parent=1 // pred_fallthru
      _
    %p36 = scmp.eq.s32.totalorder 0, 0
    // Predicated region
    $region18: #{tpu_custom_call.1} parent=1 // pred_check
      %p37 = pneg %p36
    $region19: #{tpu_custom_call.1} parent=1 // pred_check_branch
      %39 = sbr.rel (%p37) target = $region21
    $region20: #{tpu_custom_call.1} parent=1 // pred_region
      %40 = vst [vmem:[#allocation2] sm:$0x1] -inf
    $region21: #{tpu_custom_call.1} parent=1 // pred_fallthru
      _
    %v41 = vld [vmem:[#allocation6] sm:$0xff]
    %v42 = vlaneseq
    %v43 = vshrl.u32 %v42, 7
    %s44 = smul.u32 0, 8
    %v45 = vstv %s44
    %v46 = vadd.s32 %v43, %v45
    %vm47 = vcmp.lt.s32.totalorder %v46, 5
    %v48 = vsel %vm47, %v41, -inf
    %v49 = vld [vmem:[#allocation2] sm:$0x1]
    %v50 = vrot.slane %v48, 4
    %v51 = vmax.f32 %v48, %v50
    %v52 = vrot.slane %v51, 2
    %v53 = vmax.f32 %v51, %v52
    %v54 = vrot.slane %v53, 1
    %v55 = vmax.f32 %v53, %v54
    %v56 = vmax.f32 %v49, %v55
    %57 = vst [vmem:[#allocation2] sm:$0x1] %v56
    // Predicated region
    $region22: #{tpu_custom_call.1} parent=1 // pred_check
      %p58 = pneg %p36
    $region23: #{tpu_custom_call.1} parent=1 // pred_check_branch
      %60 = sbr.rel (%p58) target = $region25
    $region24: #{tpu_custom_call.1} parent=1 // pred_region
      %v61 = vld [vmem:[#allocation3] sm:$0x1]
      %v62 = vld [vmem:[#allocation2] sm:$0x1]
      %v63 = vsub.f32 %v61, %v62
      %v64 = vsub.f32 1.0, %v63
      %v65 = vmax.f32 %v64, 0.0
      %66 = vst [vmem:[#allocation8] sm:$0x1] %v65
    $region25: #{tpu_custom_call.1} parent=1 // pred_fallthru
      _
    // Predicated region
    $region26: #{tpu_custom_call.1} parent=1 // pred_check
      _
    $region27: #{tpu_custom_call.1} parent=1 // pred_check_branch
      %68 = sbr.rel (0) target = $region29
    $region28: #{tpu_custom_call.1} parent=1 // pred_region
      %s70 = ssub.s32 16, 16
      %71 = vsyncadd [#allocation5], %s70
      %s73 = sshll.u32 [#allocation8], 4
      %s74 = int_to_ptr.vmem [resolvable:$true] %s73
      %76 = dma.vmem_to_hbm [thread:$0]  %s74, 16, %s2, [#allocation5]
    $region29: #{tpu_custom_call.1} parent=1 // pred_fallthru
      _
    // Predicated region
    $region30: #{tpu_custom_call.1} parent=1 // pred_check
      _
    $region31: #{tpu_custom_call.1} parent=1 // pred_check_branch
      %78 = sbr.rel (0) target = $region33
    $region32: #{tpu_custom_call.1} parent=1 // pred_region
      %79 = dma.done [#allocation5], 16
    $region33: #{tpu_custom_call.1} parent=1 // pred_fallthru
      _
    %80 = vsyncpa [#allocation4], 1
    %81 = vsyncpa [#allocation7], 1
    %82 = vsyncpa [#allocation5], 1

</llo_original>
